<compile_context>
chip_gen: v6e
topology: v6e:2x2x1
jax: 0.10.0
libtpu: 0.0.40
codegen_flags: <defaults>
</compile_context>

<pallas_src>
import jax
import jax.numpy as jnp
from jax.experimental import pallas as pl
from jax.experimental.pallas import tpu as pltpu

_LANE = 128     # lane width: feature-dim padding target
_SUBLANE = 8    # sublane width: batch-tile granularity
_TILE_B = 512   # max batch rows per grid step (well under VMEM limits)


def _round_up(x: int, m: int) -> int:
    return (x + m - 1) // m * m


def _time_mlp_kernel(t_ref, w1_ref, b1_ref, w2_ref, b2_ref, o_ref):
    """out = silu(t @ w1 + b1) @ w2 + b2; all blocks lane-dense (128-padded)."""
    # First linear (MXU), f32 accumulation.
    h = jnp.dot(t_ref[...], w1_ref[...], preferred_element_type=jnp.float32)
    h = h + b1_ref[...].astype(jnp.float32)

    # SiLU: x * sigmoid(x) = x * 1/(1 + exp(-x)).
    # exp + approximate reciprocal both use the EUP slot (free vs. VPU divide).
    h = h * pl.reciprocal(1.0 + jnp.exp(-h), approx=True)

    # Second linear (MXU). Cast only when weights are narrower than f32.
    lhs = h if h.dtype == w2_ref.dtype else h.astype(w2_ref.dtype)
    o = jnp.dot(lhs, w2_ref[...], preferred_element_type=jnp.float32)
    o = o + b2_ref[...].astype(jnp.float32)
    o_ref[...] = o.astype(o_ref.dtype)


def time_mlp_forward(t, w1p, b1p, w2p, b2p, *, out_features, tile_b=_TILE_B):
    """Fused time-MLP forward.

    t:   (B, in_features) activations (any B).
    w1p: (in_pad, out_pad)  = W1.T zero-padded to 128-lane multiples.
    b1p: (1, out_pad)       zero-padded.
    w2p: (out_pad, out_pad) = W2.T zero-padded.
    b2p: (1, out_pad)       zero-padded.
    Returns (B, out_features).
    """
    B, in_f = t.shape
    in_pad, out_pad = w1p.shape

    # Pad the feature (lane) axis of t so K matches the padded weights.
    if in_f != in_pad:
        t = jnp.pad(t, ((0, 0), (0, in_pad - in_f)))

    # Batch tiling: up to `tile_b` sublane-aligned rows per grid step. The
    # auto double-buffered pipeline streams t/out while the tiny weights stay
    # resident; per-step VMEM use stays far below default scoped limits even
    # on v7x (64 MiB physical), so no vmem_limit_bytes override is needed.
    tile_b = min(tile_b, _round_up(B, _SUBLANE))
    b_pad = _round_up(B, tile_b)
    if b_pad != B:
        t = jnp.pad(t, ((0, b_pad - B), (0, 0)))
    grid = (pl.cdiv(b_pad, tile_b),)

    resident = lambda shape: pl.BlockSpec(shape, lambda i: (0, 0))
    out = pl.pallas_call(
        _time_mlp_kernel,
        out_shape=jax.ShapeDtypeStruct((b_pad, out_pad), t.dtype),
        grid=grid,
        in_specs=[
            pl.BlockSpec((tile_b, in_pad), lambda i: (i, 0)),   # t streams over B
            resident((in_pad, out_pad)),                        # w1 (VMEM-resident)
            resident((1, out_pad)),                             # b1
            resident((out_pad, out_pad)),                       # w2
            resident((1, out_pad)),                             # b2
        ],
        out_specs=pl.BlockSpec((tile_b, out_pad), lambda i: (i, 0)),
        compiler_params=pltpu.CompilerParams(
            dimension_semantics=("parallel",),   # shard batch tiles across TCs (v7x)
        ),
    )(t, w1p, b1p, w2p, b2p)

    # Strip batch/lane padding (padded weight rows/cols are zero -> exact slice).
    return out[:B, :out_features]


def init_time_mlp_params(key, in_features, out_features, dtype=jnp.float32):
    """nn.Linear-style U(-1/sqrt(fan_in), 1/sqrt(fan_in)) init, logical shapes.

    Weights are stored transposed vs. PyTorch: (in, out)."""
    k1, k2, k3, k4 = jax.random.split(key, 4)
    bound1 = 1.0 / (in_features ** 0.5)
    bound2 = 1.0 / (out_features ** 0.5)
    w1 = jax.random.uniform(k1, (in_features, out_features), dtype, -bound1, bound1)
    b1 = jax.random.uniform(k2, (1, out_features), dtype, -bound1, bound1)
    w2 = jax.random.uniform(k3, (out_features, out_features), dtype, -bound2, bound2)
    b2 = jax.random.uniform(k4, (1, out_features), dtype, -bound2, bound2)
    return w1, b1, w2, b2


def pad_time_mlp_params(w1, b1, w2, b2):
    """Zero-pad feature dims to 128-lane multiples (done once, offline).

    Zero padding guarantees padded hidden columns are exactly 0 (SiLU(0)=0)
    and padded output columns are exactly 0, so the final slice is exact."""
    in_f, out_f = w1.shape
    in_pad = _round_up(in_f, _LANE)
    out_pad = _round_up(out_f, _LANE)

    def pad2(x, rows, cols):
        pr, pc = rows - x.shape[0], cols - x.shape[1]
        return jnp.pad(x, ((0, pr), (0, pc))) if (pr or pc) else x

    return (pad2(w1, in_pad, out_pad), pad2(b1, 1, out_pad),
            pad2(w2, out_pad, out_pad), pad2(b2, 1, out_pad))


def time_mlp_reference(t, w1, b1, w2, b2):
    h = t @ w1 + b1
    h = h * jax.nn.sigmoid(h)
    return h @ w2 + b2


if __name__ == "__main__":
    key = jax.random.PRNGKey(0)
    k_param, k_input = jax.random.split(key)

    batch, in_features, out_features = 8, 32, 64
    w1, b1, w2, b2 = init_time_mlp_params(k_param, in_features, out_features)
    t = jax.random.normal(k_input, (batch, in_features), jnp.float32)

    padded = pad_time_mlp_params(w1, b1, w2, b2)
    out = time_mlp_forward(t, *padded, out_features=out_features)
    out = jax.block_until_ready(out)

    ref = time_mlp_reference(t, w1, b1, w2, b2)
    assert out.shape == (batch, out_features)
    # approx reciprocal in SiLU introduces ~1e-4 relative error; keep a modest
    # tolerance (tighten to 1e-5 with approx=False if bit-accuracy matters).
    assert jnp.allclose(out, ref, atol=2e-3, rtol=2e-3), "mismatch vs reference"

    print("KERNEL_OK")
</pallas_src>

<mosaic_0001>
module attributes {stable_mosaic.version = 11 : i64} {
  func.func @_time_mlp_kernel(%arg0: i32, %arg1: memref<8x128xf32, #tpu.memory_space<vmem>>, %arg2: memref<128x128xf32, #tpu.memory_space<vmem>>, %arg3: memref<1x128xf32, #tpu.memory_space<vmem>>, %arg4: memref<128x128xf32, #tpu.memory_space<vmem>>, %arg5: memref<1x128xf32, #tpu.memory_space<vmem>>, %arg6: memref<8x128xf32, #tpu.memory_space<vmem>>) attributes {dimension_semantics = [#tpu.dimension_semantics<parallel>], iteration_bounds = array<i64: 1>, scalar_prefetch = 0 : i64, scratch_operands = 0 : i64, tpu.core_type = #tpu.core_type<tc>, window_params = [{transform_indices = @transform_0, window_bounds = array<i64: 8, 128>}, {pipeline_mode = #tpu.pipeline_mode<synchronous>, transform_indices = @transform_1, window_bounds = array<i64: 128, 128>}, {pipeline_mode = #tpu.pipeline_mode<synchronous>, transform_indices = @transform_2, window_bounds = array<i64: 1, 128>}, {pipeline_mode = #tpu.pipeline_mode<synchronous>, transform_indices = @transform_3, window_bounds = array<i64: 128, 128>}, {pipeline_mode = #tpu.pipeline_mode<synchronous>, transform_indices = @transform_4, window_bounds = array<i64: 1, 128>}, {transform_indices = @transform_5, window_bounds = array<i64: 8, 128>}]} {
    %c0 = arith.constant 0 : index
    %c0_0 = arith.constant 0 : index
    %0 = vector.load %arg1[%c0, %c0_0] : memref<8x128xf32, #tpu.memory_space<vmem>>, vector<8x128xf32>
    %c0_1 = arith.constant 0 : index
    %c0_2 = arith.constant 0 : index
    %1 = vector.load %arg2[%c0_1, %c0_2] : memref<128x128xf32, #tpu.memory_space<vmem>>, vector<128x128xf32>
    %cst = arith.constant dense<0.000000e+00> : vector<8x128xf32>
    %2 = tpu.matmul %0, %1, %cst {dimension_numbers = #tpu.dot_dimension_numbers<[1], [0], [0], [1], [0, 0, 1, 1], [], []>} : vector<8x128xf32>, vector<128x128xf32>, vector<8x128xf32> -> vector<8x128xf32>
    %c0_3 = arith.constant 0 : index
    %c0_4 = arith.constant 0 : index
    %3 = vector.load %arg3[%c0_3, %c0_4] : memref<1x128xf32, #tpu.memory_space<vmem>>, vector<1x128xf32>
    %4 = vector.broadcast %3 : vector<1x128xf32> to vector<8x128xf32>
    %5 = arith.addf %2, %4 : vector<8x128xf32>
    %cst_5 = arith.constant 0.000000e+00 : f32
    %6 = vector.broadcast %cst_5 : f32 to vector<8x128xf32>
    %7 = arith.subf %6, %5 : vector<8x128xf32>
    %8 = math.exp %7 : vector<8x128xf32>
    %cst_6 = arith.constant 1.000000e+00 : f32
    %9 = vector.broadcast %cst_6 : f32 to vector<8x128xf32>
    %10 = arith.addf %9, %8 : vector<8x128xf32>
    %11 = tpu.reciprocal %10 {approx = true} : vector<8x128xf32> -> vector<8x128xf32>
    %12 = arith.mulf %5, %11 : vector<8x128xf32>
    %c0_7 = arith.constant 0 : index
    %c0_8 = arith.constant 0 : index
    %13 = vector.load %arg4[%c0_7, %c0_8] : memref<128x128xf32, #tpu.memory_space<vmem>>, vector<128x128xf32>
    %cst_9 = arith.constant dense<0.000000e+00> : vector<8x128xf32>
    %14 = tpu.matmul %12, %13, %cst_9 {dimension_numbers = #tpu.dot_dimension_numbers<[1], [0], [0], [1], [0, 0, 1, 1], [], []>} : vector<8x128xf32>, vector<128x128xf32>, vector<8x128xf32> -> vector<8x128xf32>
    %c0_10 = arith.constant 0 : index
    %c0_11 = arith.constant 0 : index
    %15 = vector.load %arg5[%c0_10, %c0_11] : memref<1x128xf32, #tpu.memory_space<vmem>>, vector<1x128xf32>
    %16 = vector.broadcast %15 : vector<1x128xf32> to vector<8x128xf32>
    %17 = arith.addf %14, %16 : vector<8x128xf32>
    %c0_12 = arith.constant 0 : index
    %c0_13 = arith.constant 0 : index
    %18 = vector.load %arg6[%c0_12, %c0_13] : memref<8x128xf32, #tpu.memory_space<vmem>>, vector<8x128xf32>
    tpu.vector_store %arg6[%c0_12, %c0_13], %17 {strides = array<i32>} : memref<8x128xf32, #tpu.memory_space<vmem>>, vector<8x128xf32>,
    return
  }
  func.func @transform_0(%arg0: i32) -> (i32, i32) {
    %c0_i32 = arith.constant 0 : i32
    %c0_i32_0 = arith.constant 0 : i32
    return %arg0, %c0_i32 : i32, i32
  }
  func.func @transform_1(%arg0: i32) -> (i32, i32) {
    %c0_i32 = arith.constant 0 : i32
    %c0_i32_0 = arith.constant 0 : i32
    %c0_i32_1 = arith.constant 0 : i32
    return %c0_i32, %c0_i32_0 : i32, i32
  }
  func.func @transform_2(%arg0: i32) -> (i32, i32) {
    %c0_i32 = arith.constant 0 : i32
    %c0_i32_0 = arith.constant 0 : i32
    %c0_i32_1 = arith.constant 0 : i32
    return %c0_i32, %c0_i32_0 : i32, i32
  }
  func.func @transform_3(%arg0: i32) -> (i32, i32) {
    %c0_i32 = arith.constant 0 : i32
    %c0_i32_0 = arith.constant 0 : i32
    %c0_i32_1 = arith.constant 0 : i32
    return %c0_i32, %c0_i32_0 : i32, i32
  }
  func.func @transform_4(%arg0: i32) -> (i32, i32) {
    %c0_i32 = arith.constant 0 : i32
    %c0_i32_0 = arith.constant 0 : i32
    %c0_i32_1 = arith.constant 0 : i32
    return %c0_i32, %c0_i32_0 : i32, i32
  }
  func.func @transform_5(%arg0: i32) -> (i32, i32) {
    %c0_i32 = arith.constant 0 : i32
    %c0_i32_0 = arith.constant 0 : i32
    return %arg0, %c0_i32 : i32, i32
  }
}

</mosaic_0001>

<llo_original>
// kernel: tpu_custom_call.1
$region0: #{tpu_custom_call.1}
  #allocation0 [shape = 'u32[]', space=smem, size = 0x4, offset = 0x4, fixed_abs, tag = 'smem constant byte address 0x4 - core index']
  #allocation1 [shape = 'u32[144,128]{1,0:T(1,128)}', space=vmem, size = 0x12000, scoped, tag = 'internal scratch']
  %s0 = inlined_call_operand.hbm [shape: f32[8,128], index: 0, kind: input, shape index: {}]
  %s1 = inlined_call_operand.hbm [shape: f32[128,128], index: 1, kind: input, shape index: {}]
  %s2 = inlined_call_operand.vmem [shape: f32[1,128], index: 2, kind: input, shape index: {}]
  %s3 = inlined_call_operand.hbm [shape: f32[128,128], index: 3, kind: input, shape index: {}]
  %s4 = inlined_call_operand.vmem [shape: f32[1,128], index: 4, kind: input, shape index: {}]
  %s5 = inlined_call_operand.hbm [shape: f32[8,128], index: 5, kind: output, shape index: {}]
  %s6 = sld [smem:[#allocation0]]
  $region42: #{tpu_custom_call.1} parent=0
    _
  %s8 = ssub.s32 1, %s6
  %s9 = scalar_select 0, %s8, %s6
  $region1: #{tpu_custom_call.1} parent=0
    #allocation2 [shape = 'u8[4096]{0}', space=vmem, size = 0x1000, scoped, tag = 'input window, operand 0, single buffered']
    #allocation3 [shape = 's32[1]{0}', space=sflag, size = 0x4, scoped, tag = 'scoped memory for tpu_custom_call.1']
    #allocation4 [shape = 's32[1]{0}', space=sflag, size = 0x4, scoped, tag = 'scoped memory for tpu_custom_call.1']
    #allocation5 [shape = 'u8[65536]{0}', space=vmem, size = 0x10000, scoped, tag = 'input window, operand 1, single buffered']
    #allocation6 [shape = 's32[1]{0}', space=sflag, size = 0x4, scoped, tag = 'scoped memory for tpu_custom_call.1']
    #allocation7 [shape = 'u8[65536]{0}', space=vmem, size = 0x10000, scoped, tag = 'input window, operand 3, single buffered']
    #allocation8 [shape = 'u8[4096]{0}', space=vmem, size = 0x1000, scoped, tag = 'output window, operand 0, single buffered']
    %10 = vsyncpa [#allocation3], 0
    %11 = vsyncpa [#allocation6], 0
    %12 = vsyncpa [#allocation4], 0
    // Predicated region
    $region2: #{tpu_custom_call.1} parent=1 // pred_check
      _
    $region3: #{tpu_custom_call.1} parent=1 // pred_check_branch
      %14 = sbr.rel (0) target = $region5
    $region4: #{tpu_custom_call.1} parent=1 // pred_region
      %s16 = ssub.s32 128, 128
      %17 = vsyncadd [#allocation3], %s16
      %s19 = sshll.u32 [#allocation2], 4
      %s20 = int_to_ptr.vmem [resolvable:$true] %s19
      %22 = dma.hbm_to_vmem [thread:$0]  %s0, 128, %s20, [#allocation3]
    $region5: #{tpu_custom_call.1} parent=1 // pred_fallthru
      _
    // Predicated region
    $region6: #{tpu_custom_call.1} parent=1 // pred_check
      _
    $region7: #{tpu_custom_call.1} parent=1 // pred_check_branch
      %24 = sbr.rel (0) target = $region9
    $region8: #{tpu_custom_call.1} parent=1 // pred_region
      %s26 = ssub.s32 2048, 2048
      %27 = vsyncadd [#allocation6], %s26
      %s28 = sshll.u32 [#allocation5], 4
      %s29 = int_to_ptr.vmem [resolvable:$true] %s28
      %34 = dma.hbm_to_vmem [thread:$0]  %s1, 2048, %s29, [#allocation6], 128, 128, 8
    $region9: #{tpu_custom_call.1} parent=1 // pred_fallthru
      _
    // Predicated region
    $region10: #{tpu_custom_call.1} parent=1 // pred_check
      _
    $region11: #{tpu_custom_call.1} parent=1 // pred_check_branch
      %36 = sbr.rel (0) target = $region13
    $region12: #{tpu_custom_call.1} parent=1 // pred_region
      _
    $region13: #{tpu_custom_call.1} parent=1 // pred_fallthru
      _
    // Predicated region
    $region14: #{tpu_custom_call.1} parent=1 // pred_check
      _
    $region15: #{tpu_custom_call.1} parent=1 // pred_check_branch
      %38 = sbr.rel (0) target = $region17
    $region16: #{tpu_custom_call.1} parent=1 // pred_region
      %s40 = ssub.s32 2048, 2048
      %41 = vsyncadd [#allocation6], %s40
      %s42 = sshll.u32 [#allocation7], 4
      %s43 = int_to_ptr.vmem [resolvable:$true] %s42
      %48 = dma.hbm_to_vmem [thread:$0]  %s3, 2048, %s43, [#allocation6], 128, 128, 8
    $region17: #{tpu_custom_call.1} parent=1 // pred_fallthru
      _
    // Predicated region
    $region18: #{tpu_custom_call.1} parent=1 // pred_check
      _
    $region19: #{tpu_custom_call.1} parent=1 // pred_check_branch
      %50 = sbr.rel (0) target = $region21
    $region20: #{tpu_custom_call.1} parent=1 // pred_region
      _
    $region21: #{tpu_custom_call.1} parent=1 // pred_fallthru
      _
    // Predicated region
    $region22: #{tpu_custom_call.1} parent=1 // pred_check
      _
    $region23: #{tpu_custom_call.1} parent=1 // pred_check_branch
      %52 = sbr.rel (0) target = $region25
    $region24: #{tpu_custom_call.1} parent=1 // pred_region
      %53 = dma.done [#allocation3], 128
    $region25: #{tpu_custom_call.1} parent=1 // pred_fallthru
      _
    // Predicated region
    $region26: #{tpu_custom_call.1} parent=1 // pred_check
      _
    $region27: #{tpu_custom_call.1} parent=1 // pred_check_branch
      %55 = sbr.rel (0) target = $region29
    $region28: #{tpu_custom_call.1} parent=1 // pred_region
      %56 = dma.done [#allocation6], 2048
    $region29: #{tpu_custom_call.1} parent=1 // pred_fallthru
      _
    // Predicated region
    $region30: #{tpu_custom_call.1} parent=1 // pred_check
      _
    $region31: #{tpu_custom_call.1} parent=1 // pred_check_branch
      %58 = sbr.rel (0) target = $region33
    $region32: #{tpu_custom_call.1} parent=1 // pred_region
      %59 = dma.done [#allocation6], 2048
    $region33: #{tpu_custom_call.1} parent=1 // pred_fallthru
      _
    %v60 = vld [vmem:[#allocation2] sm:$0xff]
    %v61 = vld [vmem:[#allocation5] sm:$0xff]
    %v62 = vld [vmem:[#allocation5 + $0x8] sm:$0xff]
    %v63 = vld [vmem:[#allocation5 + $0x10] sm:$0xff]
    %v64 = vld [vmem:[#allocation5 + $0x18] sm:$0xff]
    %v65 = vld [vmem:[#allocation5 + $0x20] sm:$0xff]
    %v66 = vld [vmem:[#allocation5 + $0x28] sm:$0xff]
    %v67 = vld [vmem:[#allocation5 + $0x30] sm:$0xff]
    %v68 = vld [vmem:[#allocation5 + $0x38] sm:$0xff]
    %v69 = vld [vmem:[#allocation5 + $0x40] sm:$0xff]
    %v70 = vld [vmem:[#allocation5 + $0x48] sm:$0xff]
    %v71 = vld [vmem:[#allocation5 + $0x50] sm:$0xff]
    %v72 = vld [vmem:[#allocation5 + $0x58] sm:$0xff]
    %v73 = vld [vmem:[#allocation5 + $0x60] sm:$0xff]
    %v74 = vld [vmem:[#allocation5 + $0x68] sm:$0xff]
    %v75 = vld [vmem:[#allocation5 + $0x70] sm:$0xff]
    %v76 = vld [vmem:[#allocation5 + $0x78] sm:$0xff]
    %v77 = vld [vmem:[%s2] sm:$0x1]
    %v79 = vlaneseq
    %v80 = vshrl.u32 %v79, 7
    %v81 = vsub.s32 0, %v80
    %v82 = vrot.slane %v77, %v81
    %84 = vmatprep.subr.mxu0 0.0
    %85 = vmatpush1.msra.mxu0 %v76
    %86 = vmatprep.subr.mxu0 0.0
    %87 = vmatpush1.msra.mxu0 %v75
    %88 = vmatprep.subr.mxu0 0.0
    %89 = vmatpush1.msra.mxu0 %v74
    %90 = vmatprep.subr.mxu0 0.0
    %91 = vmatpush1.msra.mxu0 %v73
    %92 = vmatprep.subr.mxu0 0.0
    %93 = vmatpush1.msra.mxu0 %v72
    %94 = vmatprep.subr.mxu0 0.0
    %95 = vmatpush1.msra.mxu0 %v71
    %96 = vmatprep.subr.mxu0 0.0
    %97 = vmatpush1.msra.mxu0 %v70
    %98 = vmatprep.subr.mxu0 0.0
    %99 = vmatpush1.msra.mxu0 %v69
    %100 = vmatprep.subr.mxu0 0.0
    %101 = vmatpush1.msra.mxu0 %v68
    %102 = vmatprep.subr.mxu0 0.0
    %103 = vmatpush1.msra.mxu0 %v67
    %104 = vmatprep.subr.mxu0 0.0
    %105 = vmatpush1.msra.mxu0 %v66
    %106 = vmatprep.subr.mxu0 0.0
    %107 = vmatpush1.msra.mxu0 %v65
    %108 = vmatprep.subr.mxu0 0.0
    %109 = vmatpush1.msra.mxu0 %v64
    %110 = vmatprep.subr.mxu0 0.0
    %111 = vmatpush1.msra.mxu0 %v63
    %112 = vmatprep.subr.mxu0 0.0
    %113 = vmatpush1.msra.mxu0 %v62
    %114 = vmatprep.subr.mxu0 0.0
    %115 = vmatpush1.msra.mxu0 %v61
    %116 = vmatprep.subr.mxu0 0.0
    %117 = vmatpush2.msra.mxu0 0.0
    %118 = vmatprep.subr.mxu0 0.0
    %119 = vmatpush2.msra.mxu0 0.0
    %120 = vmatprep.subr.mxu0 0.0
    %121 = vmatpush2.msra.mxu0 0.0
    %122 = vmatprep.subr.mxu0 0.0
    %123 = vmatpush2.msra.mxu0 0.0
    %124 = vmatprep.subr.mxu0 0.0
    %125 = vmatpush2.msra.mxu0 0.0
    %126 = vmatprep.subr.mxu0 0.0
    %127 = vmatpush2.msra.mxu0 0.0
    %128 = vmatprep.subr.mxu0 0.0
    %129 = vmatpush2.msra.mxu0 0.0
    %130 = vmatprep.subr.mxu0 0.0
    %131 = vmatpush2.msra.mxu0 0.0
    %132 = vmatprep.subr.mxu0 0.0
    %133 = vmatpush2.msra.mxu0 0.0
    %134 = vmatprep.subr.mxu0 0.0
    %135 = vmatpush2.msra.mxu0 0.0
    %136 = vmatprep.subr.mxu0 0.0
    %137 = vmatpush2.msra.mxu0 0.0
    %138 = vmatprep.subr.mxu0 0.0
    %139 = vmatpush2.msra.mxu0 0.0
    %140 = vmatprep.subr.mxu0 0.0
    %141 = vmatpush2.msra.mxu0 0.0
    %142 = vmatprep.subr.mxu0 0.0
    %143 = vmatpush2.msra.mxu0 0.0
    %144 = vmatprep.subr.mxu0 0.0
    %145 = vmatpush2.msra.mxu0 0.0
    %146 = vmatprep.subr.mxu0 0.0
    %147 = vmatpush2.msra.mxu0 0.0
    %148 = vmatprep.mubr.f32.mxu0 0.0
    %149 = vmatmul.mubr.f32.gmra.mxu0 %v60
    %v150 = vpop.f32.mrf.mxu0
    %v151 = vadd.f32 %v82, %v150
    %v152 = vpop.f32.mrf.mxu0
    %153 = vdwg.mxu0
    %v154 = vsub.f32 0.0, %v151
    %v155 = vmul.f32 %v154, 1.442695
    %v156 = vpow.pop %v155
    %v157 = vadd.f32 %v156, 1.0
    %v158 = vrcp.pop %v157
    %v159 = vmul.f32 %v151, %v158
    %v160 = vld [vmem:[#allocation7] sm:$0xff]
    %v161 = vld [vmem:[#allocation7 + $0x8] sm:$0xff]
    %v162 = vld [vmem:[#allocation7 + $0x10] sm:$0xff]
    %v163 = vld [vmem:[#allocation7 + $0x18] sm:$0xff]
    %v164 = vld [vmem:[#allocation7 + $0x20] sm:$0xff]
    %v165 = vld [vmem:[#allocation7 + $0x28] sm:$0xff]
    %v166 = vld [vmem:[#allocation7 + $0x30] sm:$0xff]
    %v167 = vld [vmem:[#allocation7 + $0x38] sm:$0xff]
    %v168 = vld [vmem:[#allocation7 + $0x40] sm:$0xff]
    %v169 = vld [vmem:[#allocation7 + $0x48] sm:$0xff]
    %v170 = vld [vmem:[#allocation7 + $0x50] sm:$0xff]
    %v171 = vld [vmem:[#allocation7 + $0x58] sm:$0xff]
    %v172 = vld [vmem:[#allocation7 + $0x60] sm:$0xff]
    %v173 = vld [vmem:[#allocation7 + $0x68] sm:$0xff]
    %v174 = vld [vmem:[#allocation7 + $0x70] sm:$0xff]
    %v175 = vld [vmem:[#allocation7 + $0x78] sm:$0xff]
    %v176 = vld [vmem:[%s4] sm:$0x1]
    %v178 = vlaneseq
    %v179 = vshrl.u32 %v178, 7
    %v180 = vsub.s32 0, %v179
    %v181 = vrot.slane %v176, %v180
    %183 = vmatprep.subr.mxu0 0.0
    %184 = vmatpush1.msra.mxu0 %v175
    %185 = vmatprep.subr.mxu0 0.0
    %186 = vmatpush1.msra.mxu0 %v174
    %187 = vmatprep.subr.mxu0 0.0
    %188 = vmatpush1.msra.mxu0 %v173
    %189 = vmatprep.subr.mxu0 0.0
    %190 = vmatpush1.msra.mxu0 %v172
    %191 = vmatprep.subr.mxu0 0.0
    %192 = vmatpush1.msra.mxu0 %v171
    %193 = vmatprep.subr.mxu0 0.0
    %194 = vmatpush1.msra.mxu0 %v170
    %195 = vmatprep.subr.mxu0 0.0
    %196 = vmatpush1.msra.mxu0 %v169
    %197 = vmatprep.subr.mxu0 0.0
    %198 = vmatpush1.msra.mxu0 %v168
    %199 = vmatprep.subr.mxu0 0.0
    %200 = vmatpush1.msra.mxu0 %v167
    %201 = vmatprep.subr.mxu0 0.0
    %202 = vmatpush1.msra.mxu0 %v166
    %203 = vmatprep.subr.mxu0 0.0
    %204 = vmatpush1.msra.mxu0 %v165
    %205 = vmatprep.subr.mxu0 0.0
    %206 = vmatpush1.msra.mxu0 %v164
    %207 = vmatprep.subr.mxu0 0.0
    %208 = vmatpush1.msra.mxu0 %v163
    %209 = vmatprep.subr.mxu0 0.0
    %210 = vmatpush1.msra.mxu0 %v162
    %211 = vmatprep.subr.mxu0 0.0
    %212 = vmatpush1.msra.mxu0 %v161
    %213 = vmatprep.subr.mxu0 0.0
    %214 = vmatpush1.msra.mxu0 %v160
    %215 = vmatprep.subr.mxu0 0.0
    %216 = vmatpush2.msra.mxu0 0.0
    %217 = vmatprep.subr.mxu0 0.0
    %218 = vmatpush2.msra.mxu0 0.0
    %219 = vmatprep.subr.mxu0 0.0
    %220 = vmatpush2.msra.mxu0 0.0
    %221 = vmatprep.subr.mxu0 0.0
    %222 = vmatpush2.msra.mxu0 0.0
    %223 = vmatprep.subr.mxu0 0.0
    %224 = vmatpush2.msra.mxu0 0.0
    %225 = vmatprep.subr.mxu0 0.0
    %226 = vmatpush2.msra.mxu0 0.0
    %227 = vmatprep.subr.mxu0 0.0
    %228 = vmatpush2.msra.mxu0 0.0
    %229 = vmatprep.subr.mxu0 0.0
    %230 = vmatpush2.msra.mxu0 0.0
    %231 = vmatprep.subr.mxu0 0.0
    %232 = vmatpush2.msra.mxu0 0.0
    %233 = vmatprep.subr.mxu0 0.0
    %234 = vmatpush2.msra.mxu0 0.0
    %235 = vmatprep.subr.mxu0 0.0
    %236 = vmatpush2.msra.mxu0 0.0
    %237 = vmatprep.subr.mxu0 0.0
    %238 = vmatpush2.msra.mxu0 0.0
    %239 = vmatprep.subr.mxu0 0.0
    %240 = vmatpush2.msra.mxu0 0.0
    %241 = vmatprep.subr.mxu0 0.0
    %242 = vmatpush2.msra.mxu0 0.0
    %243 = vmatprep.subr.mxu0 0.0
    %244 = vmatpush2.msra.mxu0 0.0
    %245 = vmatprep.subr.mxu0 0.0
    %246 = vmatpush2.msra.mxu0 0.0
    %247 = vmatprep.mubr.f32.mxu0 0.0
    %248 = vmatmul.mubr.f32.gmra.mxu0 %v159
    %v249 = vpop.f32.mrf.mxu0
    %v250 = vadd.f32 %v181, %v249
    %v251 = vpop.f32.mrf.mxu0
    %252 = vdwg.mxu0
    %253 = vst [vmem:[#allocation8] sm:$0xff] %v250
    // Predicated region
    $region34: #{tpu_custom_call.1} parent=1 // pred_check
      _
    $region35: #{tpu_custom_call.1} parent=1 // pred_check_branch
      %255 = sbr.rel (0) target = $region37
    $region36: #{tpu_custom_call.1} parent=1 // pred_region
      %s257 = ssub.s32 128, 128
      %258 = vsyncadd [#allocation4], %s257
      %s260 = sshll.u32 [#allocation8], 4
      %s261 = int_to_ptr.vmem [resolvable:$true] %s260
      %263 = dma.vmem_to_hbm [thread:$0]  %s261, 128, %s5, [#allocation4]
    $region37: #{tpu_custom_call.1} parent=1 // pred_fallthru
      _
    // Predicated region
    $region38: #{tpu_custom_call.1} parent=1 // pred_check
      _
    $region39: #{tpu_custom_call.1} parent=1 // pred_check_branch
      %265 = sbr.rel (0) target = $region41
    $region40: #{tpu_custom_call.1} parent=1 // pred_region
      %266 = dma.done [#allocation4], 128
    $region41: #{tpu_custom_call.1} parent=1 // pred_fallthru
      _
    %267 = vsyncpa [#allocation3], 1
    %268 = vsyncpa [#allocation6], 1
    %269 = vsyncpa [#allocation4], 1

</llo_original>
